<compile_context>
chip_gen: v7x
topology: tpu7x:2x2x1
jax: 0.10.0
libtpu: 0.0.40
codegen_flags: <defaults>
</compile_context>

<pallas_src>
from functools import partial

import jax
import jax.numpy as jnp
from jax import lax
from jax.experimental import pallas as pl
from jax.experimental.pallas import tpu as pltpu

NEMB = 158        # matches `nemb` in the PyTorch script
BLOCKSIZ = 128    # causal mask limit (T <= BLOCKSIZ)
DROPOUT = 0.2     # eval-mode -> identity (see TODO in kernel)

MASK_VAL = -1e30  # finite sentinel; every causal row keeps its diagonal, so rows never go empty


def head_kernel(x_ref, w_ref, o_ref, *, transpose_out):
    # x_ref: (Bt, T, C)   w_ref: (C, 3H) bf16 (= [wk | wq*H^-0.5 | wv])
    # o_ref: (Bt, H, T) if transpose_out else (Bt, T, H)
    Bt, T, C = x_ref.shape
    H = w_ref.shape[1] // 3

    x = x_ref[...].astype(jnp.bfloat16)          # (Bt, T, C)
    w_kqv = w_ref[...]                           # (C, 3H), already bf16 (no per-step cast)

    # Fused K/Q/V projection.  Flatten (Bt, T) when that is a no-op relayout (T % 8 == 0) so a
    # single better-filled (Bt*T, C) x (C, 3H) matmul feeds the MXU.
    if T % 8 == 0:
        kqv = jnp.dot(x.reshape(Bt * T, C), w_kqv,
                      preferred_element_type=jnp.float32).reshape(Bt, T, 3 * H)
    else:
        kqv = jnp.einsum('btc,cf->btf', x, w_kqv, preferred_element_type=jnp.float32)

    # NOTE: these sub-vreg lane slices (offsets 0/H/2H inside one 128-lane vreg) each cost a
    # lane relayout; padding each segment to a 128-lane boundary would remove them but adds
    # MXU N-passes on the projection -> profile-gated, not applied by default.
    k = kqv[..., 0 * H:1 * H].astype(jnp.bfloat16)     # (Bt, T, H)
    q = kqv[..., 1 * H:2 * H].astype(jnp.bfloat16)     # 1/sqrt(H) already folded into wq
    v = kqv[..., 2 * H:3 * H].astype(jnp.bfloat16)

    # Scores (no explicit transpose through the XLU), causal mask, stable exp.
    s = jnp.einsum('bqh,bkh->bqk', q, k, preferred_element_type=jnp.float32)   # (Bt, T, T)
    rows = lax.broadcasted_iota(jnp.int32, (T, T), 0)
    cols = lax.broadcasted_iota(jnp.int32, (T, T), 1)
    s = jnp.where(rows >= cols, s, MASK_VAL)

    # TODO(synk): on v6e/v7x a bf16 exp here would roughly double single-EUP throughput.
    e = jnp.exp(s - jnp.max(s, axis=-1, keepdims=True))                        # (Bt, T, T) f32
    l = jnp.sum(e, axis=-1, keepdims=True)                                     # (Bt, T, 1)

    # TODO(synk): dropout treated as eval-mode identity; PyTorch train-mode RNG not reproduced.

    # PV matmul on un-normalized probabilities; normalization deferred to the (Bt,T,H) result.
    o = jnp.einsum('bqk,bkh->bqh', e.astype(jnp.bfloat16), v,
                   preferred_element_type=jnp.float32)                         # (Bt, T, H)
    o = o * pl.reciprocal(l, approx=True)                                      # EUP, not VPU divide

    if transpose_out:
        o = jnp.swapaxes(o, 1, 2)        # (Bt, H, T): lane-dense store; XLU has slack here
    o_ref[...] = o.astype(o_ref.dtype)


def _num_tensorcores():
    """TensorCores per chip: v7x has 2, earlier generations 1. Defensive default = 1."""
    try:
        kind = jax.devices()[0].device_kind.lower()
        return 2 if "v7" in kind else 1
    except Exception:
        return 1


def _pick_batch_tile(B, T, C, H, *, budget_bytes=10 << 20, min_steps=1):
    """Largest divisor Bt of B whose per-step working set fits the VMEM budget while keeping
    at least `min_steps` grid steps (>= 2 per TensorCore on v7x when B allows)."""
    best = 1
    for d in range(1, B + 1):
        if B % d or (B // d) < min_steps:
            continue
        # 2x-buffered x/out DMA blocks + bf16 copies + kqv/q/k/v + scores/exp + resident weights
        work = d * T * (10 * C + 38 * H + 10 * T) + 12 * C * H
        if work <= budget_bytes:
            best = d
    return best


def head_forward(x, wk, wq, wv):
    B, T, C = x.shape
    H = wk.shape[1]
    assert T <= BLOCKSIZ and C == NEMB

    # Fold 1/sqrt(H) into wq, fuse [wk|wq|wv] into one slab, pre-cast to bf16 for the MXU.
    w_kqv = jnp.concatenate([wk, wq * (float(H) ** -0.5), wv], axis=1).astype(jnp.bfloat16)

    ncores = _num_tensorcores()
    min_steps = 1 if ncores == 1 else min(B, 2 * ncores)
    Bt = _pick_batch_tile(B, T, C, H, min_steps=min_steps)
    grid = (B // Bt,)

    # Lane-dense store only pays off when T is the wider axis (T = blocksiz = 128 typically).
    transpose_out = T >= H
    out_shape = (B, H, T) if transpose_out else (B, T, H)
    out_block = (Bt, H, T) if transpose_out else (Bt, T, H)

    out = pl.pallas_call(
        partial(head_kernel, transpose_out=transpose_out),
        out_shape=jax.ShapeDtypeStruct(out_shape, x.dtype),
        grid_spec=pltpu.PrefetchScalarGridSpec(
            num_scalar_prefetch=0,
            grid=grid,
            in_specs=[
                pl.BlockSpec((Bt, T, C), lambda b: (b, 0, 0)),   # Bt batch elements per step
                pl.BlockSpec((C, 3 * H), lambda b: (0, 0)),      # constant index -> resident
            ],
            out_specs=pl.BlockSpec(out_block, lambda b: (b, 0, 0)),
        ),
        compiler_params=pltpu.CompilerParams(
            dimension_semantics=("parallel",),
            vmem_limit_bytes=32 * 1024 * 1024,   # explicit headroom over the ~10 MiB budget
        ),
    )(x, w_kqv)

    return jnp.swapaxes(out, 1, 2) if transpose_out else out


def head_reference(x, wk, wq, wv):
    """Pure-JAX f32 reference of the PyTorch forward (eval mode)."""
    k = x @ wk
    q = x @ wq
    v = x @ wv
    w = (q @ jnp.swapaxes(k, -2, -1)) * (k.shape[-1] ** -0.5)
    T = x.shape[1]
    mask = jnp.tril(jnp.ones((T, T), dtype=bool))
    w = jnp.where(mask, w, -jnp.inf)
    w = jax.nn.softmax(w, axis=-1)
    return w @ v


if __name__ == "__main__":
    HEADSIZ = 16

    key = jax.random.PRNGKey(0)
    kx, kk, kq, kv = jax.random.split(key, 4)

    # nn.Linear(nemb, headsiz, bias=False): weight is (headsiz, nemb); stored transposed here.
    scale = 1.0 / (NEMB ** 0.5)
    wk = jax.random.uniform(kk, (NEMB, HEADSIZ), jnp.float32, -scale, scale)
    wq = jax.random.uniform(kq, (NEMB, HEADSIZ), jnp.float32, -scale, scale)
    wv = jax.random.uniform(kv, (NEMB, HEADSIZ), jnp.float32, -scale, scale)

    # Exercise both output layouts: natural (T < H) and lane-dense transposed (T >= H).
    for (B, T) in [(4, 8), (8, 128)]:
        x = jax.random.normal(jax.random.fold_in(kx, T), (B, T, NEMB), dtype=jnp.float32)
        out = jax.block_until_ready(head_forward(x, wk, wq, wv))
        ref = head_reference(x, wk, wq, wv)
        assert out.shape == (B, T, HEADSIZ)
        # bf16 MXU operands (f32 accumulation) + approx-reciprocal softmax -> relaxed tolerance.
        assert jnp.allclose(out, ref, atol=3e-2, rtol=3e-2), f"mismatch vs reference at T={T}"

    print("KERNEL_OK")
</pallas_src>

<mosaic_0001>
module attributes {stable_mosaic.version = 11 : i64} {
  func.func @head_kernel(%arg0: i32, %arg1: memref<4x8x158xf32, #tpu.memory_space<vmem>>, %arg2: memref<158x48xbf16, #tpu.memory_space<vmem>>, %arg3: memref<4x8x16xf32, #tpu.memory_space<vmem>>) attributes {dimension_semantics = [#tpu.dimension_semantics<parallel>], iteration_bounds = array<i64: 1>, scalar_prefetch = 0 : i64, scratch_operands = 0 : i64, tpu.core_type = #tpu.core_type<tc>, window_params = [{transform_indices = @transform_0, window_bounds = array<i64: 4, 8, 158>}, {pipeline_mode = #tpu.pipeline_mode<synchronous>, transform_indices = @transform_1, window_bounds = array<i64: 158, 48>}, {transform_indices = @transform_2, window_bounds = array<i64: 4, 8, 16>}]} {
    %c0 = arith.constant 0 : index
    %c0_0 = arith.constant 0 : index
    %c0_1 = arith.constant 0 : index
    %0 = vector.load %arg1[%c0, %c0_0, %c0_1] : memref<4x8x158xf32, #tpu.memory_space<vmem>>, vector<4x8x158xf32>
    %1 = arith.truncf %0 : vector<4x8x158xf32> to vector<4x8x158xbf16>
    %c0_2 = arith.constant 0 : index
    %c0_3 = arith.constant 0 : index
    %2 = vector.load %arg2[%c0_2, %c0_3] : memref<158x48xbf16, #tpu.memory_space<vmem>>, vector<158x48xbf16>
    %3 = vector.shape_cast %1 : vector<4x8x158xbf16> to vector<32x158xbf16>
    %cst = arith.constant dense<0.000000e+00> : vector<32x48xf32>
    %4 = tpu.matmul %3, %2, %cst {dimension_numbers = #tpu.dot_dimension_numbers<[1], [0], [0], [1], [0, 0, 1, 1], [], []>} : vector<32x158xbf16>, vector<158x48xbf16>, vector<32x48xf32> -> vector<32x48xf32>
    %5 = vector.shape_cast %4 : vector<32x48xf32> to vector<4x8x48xf32>
    %6 = vector.extract_strided_slice %5 {offsets = [0, 0, 0], sizes = [4, 8, 16], strides = [1, 1, 1]} : vector<4x8x48xf32> to vector<4x8x16xf32>
    %7 = arith.truncf %6 : vector<4x8x16xf32> to vector<4x8x16xbf16>
    %8 = vector.extract_strided_slice %5 {offsets = [0, 0, 16], sizes = [4, 8, 16], strides = [1, 1, 1]} : vector<4x8x48xf32> to vector<4x8x16xf32>
    %9 = arith.truncf %8 : vector<4x8x16xf32> to vector<4x8x16xbf16>
    %10 = vector.extract_strided_slice %5 {offsets = [0, 0, 32], sizes = [4, 8, 16], strides = [1, 1, 1]} : vector<4x8x48xf32> to vector<4x8x16xf32>
    %11 = arith.truncf %10 : vector<4x8x16xf32> to vector<4x8x16xbf16>
    "tpu.trace_start"() <{level = 10 : i32, message = "bqh,bkh->bqk"}> : () -> ()
    %cst_4 = arith.constant dense<0.000000e+00> : vector<4x8x8xf32>
    %12 = tpu.matmul %9, %7, %cst_4 {dimension_numbers = #tpu.dot_dimension_numbers<[2], [2], [1], [1], [0, 0, 0, 1, 1, 1], [0], [0]>} : vector<4x8x16xbf16>, vector<4x8x16xbf16>, vector<4x8x8xf32> -> vector<4x8x8xf32>
    "tpu.trace_stop"() : () -> ()
    %13 = tpu.iota {dimensions = array<i32: 0>} : vector<8x8xi32>
    %14 = tpu.iota {dimensions = array<i32: 1>} : vector<8x8xi32>
    %15 = arith.cmpi sge, %13, %14 : vector<8x8xi32>
    %cst_5 = arith.constant -1.000000e+30 : f32
    %16 = vector.shape_cast %15 : vector<8x8xi1> to vector<1x8x8xi1>
    %17 = vector.broadcast %16 : vector<1x8x8xi1> to vector<4x8x8xi1>
    %18 = vector.broadcast %cst_5 : f32 to vector<4x8x8xf32>
    %19 = arith.select %17, %12, %18 : vector<4x8x8xi1>, vector<4x8x8xf32>
    %cst_6 = arith.constant dense<0xFF800000> : vector<4x8xf32>
    %20 = vector.multi_reduction <maximumf>, %19, %cst_6 [2] : vector<4x8x8xf32> to vector<4x8xf32>
    %21 = vector.shape_cast %20 : vector<4x8xf32> to vector<4x8x1xf32>
    %22 = vector.broadcast %21 : vector<4x8x1xf32> to vector<4x8x8xf32>
    %23 = arith.subf %19, %22 : vector<4x8x8xf32>
    %24 = math.exp %23 : vector<4x8x8xf32>
    %cst_7 = arith.constant dense<0.000000e+00> : vector<4x8xf32>
    %25 = vector.multi_reduction <add>, %24, %cst_7 [2] : vector<4x8x8xf32> to vector<4x8xf32>
    %26 = vector.shape_cast %25 : vector<4x8xf32> to vector<4x8x1xf32>
    %27 = arith.truncf %24 : vector<4x8x8xf32> to vector<4x8x8xbf16>
    "tpu.trace_start"() <{level = 10 : i32, message = "bqk,bkh->bqh"}> : () -> ()
    %cst_8 = arith.constant dense<0.000000e+00> : vector<4x8x16xf32>
    %28 = tpu.matmul %27, %11, %cst_8 {dimension_numbers = #tpu.dot_dimension_numbers<[2], [1], [1], [2], [0, 0, 0, 1, 1, 2], [0], [0]>} : vector<4x8x8xbf16>, vector<4x8x16xbf16>, vector<4x8x16xf32> -> vector<4x8x16xf32>
    "tpu.trace_stop"() : () -> ()
    %29 = tpu.reciprocal %26 {approx = true} : vector<4x8x1xf32> -> vector<4x8x1xf32>
    %30 = vector.broadcast %29 : vector<4x8x1xf32> to vector<4x8x16xf32>
    %31 = arith.mulf %28, %30 : vector<4x8x16xf32>
    %c0_9 = arith.constant 0 : index
    %c0_10 = arith.constant 0 : index
    %c0_11 = arith.constant 0 : index
    %32 = vector.load %arg3[%c0_9, %c0_10, %c0_11] : memref<4x8x16xf32, #tpu.memory_space<vmem>>, vector<4x8x16xf32>
    tpu.vector_store %arg3[%c0_9, %c0_10, %c0_11], %31 {strides = array<i32>} : memref<4x8x16xf32, #tpu.memory_space<vmem>>, vector<4x8x16xf32>,
    return
  }
  func.func @transform_0(%arg0: i32) -> (i32, i32, i32) {
    %c0_i32 = arith.constant 0 : i32
    %c0_i32_0 = arith.constant 0 : i32
    %c0_i32_1 = arith.constant 0 : i32
    return %arg0, %c0_i32, %c0_i32_0 : i32, i32, i32
  }
  func.func @transform_1(%arg0: i32) -> (i32, i32) {
    %c0_i32 = arith.constant 0 : i32
    %c0_i32_0 = arith.constant 0 : i32
    %c0_i32_1 = arith.constant 0 : i32
    return %c0_i32, %c0_i32_0 : i32, i32
  }
  func.func @transform_2(%arg0: i32) -> (i32, i32, i32) {
    %c0_i32 = arith.constant 0 : i32
    %c0_i32_0 = arith.constant 0 : i32
    %c0_i32_1 = arith.constant 0 : i32
    return %arg0, %c0_i32, %c0_i32_0 : i32, i32, i32
  }
}

</mosaic_0001>

<llo_original>
// kernel: tpu_custom_call.1
$region0: #{tpu_custom_call.1}
  #allocation0 [shape = 'u32[]', space=smem, size = 0x4, offset = 0x4, fixed_abs, tag = 'smem constant byte address 0x4 - core index']
  #allocation1 [shape = 'u32[144,128]{1,0:T(1,128)}', space=vmem, size = 0x12000, scoped, tag = 'internal scratch']
  %s0 = inlined_call_operand.vmem [shape: f32[4,8,158], index: 0, kind: input, shape index: {}]
  %s1 = inlined_call_operand.vmem [shape: bf16[158,48], index: 1, kind: input, shape index: {}]
  %s2 = inlined_call_operand.hbm [shape: f32[4,8,16], index: 2, kind: output, shape index: {}]
  %s3 = sld [smem:[#allocation0]]
  $region18: #{tpu_custom_call.1} parent=0
    _
  %s5 = ssub.s32 1, %s3
  %s6 = scalar_select 0, %s5, %s3
  $region1: #{tpu_custom_call.1} parent=0
    #allocation2 [shape = 'u8[16384]{0}', space=vmem, size = 0x4000, scoped, tag = 'output window, operand 0, single buffered']
    #allocation3 [shape = 's32[1]{0}', space=sflag, size = 0x4, scoped, tag = 'scoped memory for tpu_custom_call.1']
    %7 = vsyncpa [#allocation3], 0
    // Predicated region
    $region2: #{tpu_custom_call.1} parent=1 // pred_check
      _
    $region3: #{tpu_custom_call.1} parent=1 // pred_check_branch
      %9 = sbr.rel (0) target = $region5
    $region4: #{tpu_custom_call.1} parent=1 // pred_region
      _
    $region5: #{tpu_custom_call.1} parent=1 // pred_fallthru
      _
    // Predicated region
    $region6: #{tpu_custom_call.1} parent=1 // pred_check
      _
    $region7: #{tpu_custom_call.1} parent=1 // pred_check_branch
      %11 = sbr.rel (0) target = $region9
    $region8: #{tpu_custom_call.1} parent=1 // pred_region
      _
    $region9: #{tpu_custom_call.1} parent=1 // pred_fallthru
      _
    %v13 = vld [vmem:[%s0] sm:$0xff]
    %v14 = vld [vmem:[%s0 + $0x8] sm:$0xff]
    %v15 = vld [vmem:[%s0 + $0x10] sm:$0xff]
    %v16 = vld [vmem:[%s0 + $0x18] sm:$0xff]
    %v17 = vld [vmem:[%s0 + $0x20] sm:$0xff]
    %v18 = vld [vmem:[%s0 + $0x28] sm:$0xff]
    %v19 = vld [vmem:[%s0 + $0x30] sm:$0xff]
    %v20 = vld [vmem:[%s0 + $0x38] sm:$0xff]
    %v21 = vpack.c.bf16 %v13, %v13
    %v22 = vpack.c.bf16 %v14, %v14
    %v23 = vpack.c.bf16 %v15, %v15
    %v24 = vpack.c.bf16 %v16, %v16
    %v25 = vpack.c.bf16 %v17, %v17
    %v26 = vpack.c.bf16 %v18, %v18
    %v27 = vpack.c.bf16 %v19, %v19
    %v28 = vpack.c.bf16 %v20, %v20
    %v29 = vld [vmem:[%s1] sm:$0xf]
    %v30 = vld [vmem:[%s1 + $0x4] sm:$0xf]
    %v31 = vld [vmem:[%s1 + $0x8] sm:$0xf]
    %v32 = vld [vmem:[%s1 + $0xc] sm:$0xf]
    %v33 = vld [vmem:[%s1 + $0x10] sm:$0xf]
    %v34 = vld [vmem:[%s1 + $0x14] sm:$0xf]
    %v35 = vld [vmem:[%s1 + $0x18] sm:$0xf]
    %v36 = vld [vmem:[%s1 + $0x1c] sm:$0xf]
    %v37 = vld [vmem:[%s1 + $0x20] sm:$0xf]
    %v38 = vld [vmem:[%s1 + $0x24] sm:$0xf]
    %v39 = vld [vmem:[%s1 + $0x28] sm:$0xf]
    %v40 = vld [vmem:[%s1 + $0x2c] sm:$0xf]
    %v41 = vld [vmem:[%s1 + $0x30] sm:$0xf]
    %v42 = vld [vmem:[%s1 + $0x34] sm:$0xf]
    %v43 = vld [vmem:[%s1 + $0x38] sm:$0xf]
    %v44 = vld [vmem:[%s1 + $0x3c] sm:$0xf]
    %v45 = vld [vmem:[%s1 + $0x40] sm:$0xf]
    %v46 = vld [vmem:[%s1 + $0x44] sm:$0xf]
    %v47 = vld [vmem:[%s1 + $0x48] sm:$0xf]
    %v48 = vld [vmem:[%s1 + $0x4c] sm:$0x7]
    %v57 = vunpack.c.l.b16 %v21
    %v58 = vunpack.c.l.b16 %v22
    %v59 = vunpack.c.l.b16 %v23
    %v60 = vunpack.c.l.b16 %v24
    %v61 = vunpack.c.l.b16 %v25
    %v62 = vunpack.c.l.b16 %v26
    %v63 = vunpack.c.l.b16 %v27
    %v64 = vunpack.c.l.b16 %v28
    %v65 = vpack.c.b16 %v59, %v57
    %v66 = vpack.c.b16 %v60, %v58
    %v67 = vpack.c.b16 %v63, %v61
    %v68 = vpack.c.b16 %v64, %v62
    %v91 = vunpack.c.l.b16 %v29
    %v92 = vunpack.c.l.b16 %v30
    %v93 = vunpack.c.l.b16 %v31
    %v94 = vunpack.c.l.b16 %v32
    %v95 = vunpack.c.l.b16 %v33
    %v96 = vunpack.c.l.b16 %v34
    %v97 = vunpack.c.l.b16 %v35
    %v98 = vunpack.c.l.b16 %v36
    %v99 = vunpack.c.l.b16 %v37
    %v100 = vunpack.c.l.b16 %v38
    %v101 = vunpack.c.l.b16 %v39
    %v102 = vunpack.c.l.b16 %v40
    %v103 = vunpack.c.l.b16 %v41
    %v104 = vunpack.c.l.b16 %v42
    %v105 = vunpack.c.l.b16 %v43
    %v106 = vunpack.c.l.b16 %v44
    %v107 = vunpack.c.l.b16 %v45
    %v108 = vunpack.c.l.b16 %v46
    %v109 = vunpack.c.l.b16 %v47
    %v110 = vunpack.c.l.b16 %v48
    %v111 = vpack.c.b16 %v92, %v91
    %v112 = vpack.c.b16 %v94, %v93
    %v113 = vpack.c.b16 %v96, %v95
    %v114 = vpack.c.b16 %v98, %v97
    %v115 = vpack.c.b16 %v100, %v99
    %v116 = vpack.c.b16 %v102, %v101
    %v117 = vpack.c.b16 %v104, %v103
    %v118 = vpack.c.b16 %v106, %v105
    %v119 = vpack.c.b16 %v108, %v107
    %v120 = vpack.c.b16 %v110, %v109
    %vm130 = vcmask 244736
    %v132 = vsel %vm130, %v66, 0
    %v135 = vsel %vm130, %v68, 0
    %vm137 = vcmask 1046528
    %v139 = vsel %vm137, %v120, 0
    %141 = vmatprep.subr.bf16.mxu0 0
    %142 = vmatpush1.bf16.msra.mxu0 %v111
    %143 = vmatprep.subr.bf16.mxu0 0
    %144 = vmatpush1.bf16.msra.mxu0 %v112
    %145 = vmatprep.subr.bf16.mxu0 0
    %146 = vmatpush1.bf16.msra.mxu0 %v113
    %147 = vmatprep.subr.bf16.mxu0 0
    %148 = vmatpush1.bf16.msra.mxu0 %v114
    %149 = vmatprep.subr.bf16.mxu0 0
    %150 = vmatpush1.bf16.msra.mxu0 %v115
    %151 = vmatprep.subr.bf16.mxu0 0
    %152 = vmatpush1.bf16.msra.mxu0 %v116
    %153 = vmatprep.subr.bf16.mxu0 0
    %154 = vmatpush1.bf16.msra.mxu0 %v117
    %155 = vmatprep.subr.bf16.mxu0 0
    %156 = vmatpush1.bf16.msra.mxu0 %v118
    %157 = vmatprep.subr.bf16.mxu0 0
    %158 = vmatpush1.bf16.msra.mxu0 %v119
    %159 = vmatprep.subr.bf16.mxu0 0
    %160 = vmatpush1.bf16.msra.mxu0 %v139
    %161 = vmatprep.subr.bf16.mxu0 0
    %162 = vmatpush1.bf16.msra.mxu0 0
    %163 = vmatprep.subr.bf16.mxu0 0
    %164 = vmatpush1.bf16.msra.mxu0 0
    %165 = vmatprep.subr.bf16.mxu0 0
    %166 = vmatpush1.bf16.msra.mxu0 0
    %167 = vmatprep.subr.bf16.mxu0 0
    %168 = vmatpush1.bf16.msra.mxu0 0
    %169 = vmatprep.subr.bf16.mxu0 0
    %170 = vmatpush1.bf16.msra.mxu0 0
    %171 = vmatprep.subr.bf16.mxu0 0
    %172 = vmatpush1.bf16.msra.mxu0 0
    %173 = vmatprep.mubr.bf16.mxu0 %v132
    %174 = vmatmul.mubr.bf16.gmra.mrb[0].mxu0 %v65
    %v175 = vpop.f32.mrb[0].mxu0
    %v176 = vadd.f32 0.0, %v175
    %v177 = vpop.f32.mrb[0].mxu0
    %v178 = vpop.f32.mrb[0].mxu0
    %v179 = vadd.f32 0.0, %v178
    %v180 = vpop.f32.mrb[0].mxu0
    %181 = vmatprep.mubr.bf16.mxu0 %v135
    %182 = vmatmul.mubr.bf16.gmra.mrb[0].mxu0 %v67
    %v183 = vpop.f32.mrb[0].mxu0
    %v184 = vadd.f32 0.0, %v183
    %v185 = vpop.f32.mrb[0].mxu0
    %v186 = vpop.f32.mrb[0].mxu0
    %v187 = vadd.f32 0.0, %v186
    %v188 = vpop.f32.mrb[0].mxu0
    %189 = vdwg.mxu0
    %v190 = vpack.c.bf16 %v176, %v176
    %v191 = vpack.c.bf16 %v179, %v179
    %v192 = vpack.c.bf16 %v184, %v184
    %v193 = vpack.c.bf16 %v187, %v187
    %195 = vrot.lane.b32.xlu0 %v190, 112
    %v196 = vpop.permute.xlu0 %195
    %vm197 = vcmask 130048
    %v199 = vsel %vm197, %v196, 0
    %v202 = vsel %vm197, %v190, 0
    %204 = vmatprep.subr.bf16.mxu0 0
    %205 = vmatpush1.bf16.xpose.msra.mxu0 %v202
    %206 = vmatprep.subr.bf16.mxu0 0
    %207 = vmatpush1.bf16.xpose.msra.mxu0 0
    %208 = vmatprep.subr.bf16.mxu0 0
    %209 = vmatpush1.bf16.xpose.msra.mxu0 0
    %210 = vmatprep.subr.bf16.mxu0 0
    %211 = vmatpush1.bf16.xpose.msra.mxu0 0
    %212 = vmatprep.subr.bf16.mxu0 0
    %213 = vmatpush1.bf16.xpose.msra.mxu0 0
    %214 = vmatprep.subr.bf16.mxu0 0
    %215 = vmatpush1.bf16.xpose.msra.mxu0 0
    %216 = vmatprep.subr.bf16.mxu0 0
    %217 = vmatpush1.bf16.xpose.msra.mxu0 0
    %218 = vmatprep.subr.bf16.mxu0 0
    %219 = vmatpush1.bf16.xpose.msra.mxu0 0
    %220 = vmatprep.subr.bf16.mxu0 0
    %221 = vmatpush1.bf16.xpose.msra.mxu0 0
    %222 = vmatprep.subr.bf16.mxu0 0
    %223 = vmatpush1.bf16.xpose.msra.mxu0 0
    %224 = vmatprep.subr.bf16.mxu0 0
    %225 = vmatpush1.bf16.xpose.msra.mxu0 0
    %226 = vmatprep.subr.bf16.mxu0 0
    %227 = vmatpush1.bf16.xpose.msra.mxu0 0
    %228 = vmatprep.subr.bf16.mxu0 0
    %229 = vmatpush1.bf16.xpose.msra.mxu0 0
    %230 = vmatprep.subr.bf16.mxu0 0
    %231 = vmatpush1.bf16.xpose.msra.mxu0 0
    %232 = vmatprep.subr.bf16.mxu0 0
    %233 = vmatpush1.bf16.xpose.msra.mxu0 0
    %234 = vmatprep.subr.bf16.mxu0 0
    %235 = vmatpush1.bf16.xpose.msra.mxu0 0
    %236 = vmatprep.mubr.bf16.mxu0 0
    %237 = vmatmul.mubr.bf16.gmra.mrb[0].mxu0 %v199
    %v238 = vpop.f32.mrb[0].mxu0
    %v239 = vadd.f32 0.0, %v238
    %v240 = vpop.f32.mrb[0].mxu0
    %v241 = vpop.f32.mrb[0].mxu0
    %v242 = vpop.f32.mrb[0].mxu0
    %243 = vdwg.mxu0
    %245 = vrot.lane.b32.xlu0 %v191, 112
    %v246 = vpop.permute.xlu0 %245
    %v248 = vsel %vm197, %v246, 0
    %v251 = vsel %vm197, %v191, 0
    %253 = vmatprep.subr.bf16.mxu0 0
    %254 = vmatpush1.bf16.xpose.msra.mxu0 %v251
    %255 = vmatprep.subr.bf16.mxu0 0
    %256 = vmatpush1.bf16.xpose.msra.mxu0 0
    %257 = vmatprep.subr.bf16.mxu0 0
    %258 = vmatpush1.bf16.xpose.msra.mxu0 0
    %259 = vmatprep.subr.bf16.mxu0 0
    %260 = vmatpush1.bf16.xpose.msra.mxu0 0
    %261 = vmatprep.subr.bf16.mxu0 0
    %262 = vmatpush1.bf16.xpose.msra.mxu0 0
    %263 = vmatprep.subr.bf16.mxu0 0
    %264 = vmatpush1.bf16.xpose.msra.mxu0 0
    %265 = vmatprep.subr.bf16.mxu0 0
    %266 = vmatpush1.bf16.xpose.msra.mxu0 0
    %267 = vmatprep.subr.bf16.mxu0 0
    %268 = vmatpush1.bf16.xpose.msra.mxu0 0
    %269 = vmatprep.subr.bf16.mxu0 0
    %270 = vmatpush1.bf16.xpose.msra.mxu0 0
    %271 = vmatprep.subr.bf16.mxu0 0
    %272 = vmatpush1.bf16.xpose.msra.mxu0 0
    %273 = vmatprep.subr.bf16.mxu0 0
    %274 = vmatpush1.bf16.xpose.msra.mxu0 0
    %275 = vmatprep.subr.bf16.mxu0 0
    %276 = vmatpush1.bf16.xpose.msra.mxu0 0
    %277 = vmatprep.subr.bf16.mxu0 0
    %278 = vmatpush1.bf16.xpose.msra.mxu0 0
    %279 = vmatprep.subr.bf16.mxu0 0
    %280 = vmatpush1.bf16.xpose.msra.mxu0 0
    %281 = vmatprep.subr.bf16.mxu0 0
    %282 = vmatpush1.bf16.xpose.msra.mxu0 0
    %283 = vmatprep.subr.bf16.mxu0 0
    %284 = vmatpush1.bf16.xpose.msra.mxu0 0
    %285 = vmatprep.mubr.bf16.mxu0 0
    %286 = vmatmul.mubr.bf16.gmra.mrb[0].mxu0 %v248
    %v287 = vpop.f32.mrb[0].mxu0
    %v288 = vadd.f32 0.0, %v287
    %v289 = vpop.f32.mrb[0].mxu0
    %v290 = vpop.f32.mrb[0].mxu0
    %v291 = vpop.f32.mrb[0].mxu0
    %292 = vdwg.mxu0
    %294 = vrot.lane.b32.xlu0 %v192, 112
    %v295 = vpop.permute.xlu0 %294
    %v297 = vsel %vm197, %v295, 0
    %v300 = vsel %vm197, %v192, 0
    %302 = vmatprep.subr.bf16.mxu0 0
    %303 = vmatpush1.bf16.xpose.msra.mxu0 %v300
    %304 = vmatprep.subr.bf16.mxu0 0
    %305 = vmatpush1.bf16.xpose.msra.mxu0 0
    %306 = vmatprep.subr.bf16.mxu0 0
    %307 = vmatpush1.bf16.xpose.msra.mxu0 0
    %308 = vmatprep.subr.bf16.mxu0 0
    %309 = vmatpush1.bf16.xpose.msra.mxu0 0
    %310 = vmatprep.subr.bf16.mxu0 0
    %311 = vmatpush1.bf16.xpose.msra.mxu0 0
    %312 = vmatprep.subr.bf16.mxu0 0
    %313 = vmatpush1.bf16.xpose.msra.mxu0 0
    %314 = vmatprep.subr.bf16.mxu0 0
    %315 = vmatpush1.bf16.xpose.msra.mxu0 0
    %316 = vmatprep.subr.bf16.mxu0 0
    %317 = vmatpush1.bf16.xpose.msra.mxu0 0
    %318 = vmatprep.subr.bf16.mxu0 0
    %319 = vmatpush1.bf16.xpose.msra.mxu0 0
    %320 = vmatprep.subr.bf16.mxu0 0
    %321 = vmatpush1.bf16.xpose.msra.mxu0 0
    %322 = vmatprep.subr.bf16.mxu0 0
    %323 = vmatpush1.bf16.xpose.msra.mxu0 0
    %324 = vmatprep.subr.bf16.mxu0 0
    %325 = vmatpush1.bf16.xpose.msra.mxu0 0
    %326 = vmatprep.subr.bf16.mxu0 0
    %327 = vmatpush1.bf16.xpose.msra.mxu0 0
    %328 = vmatprep.subr.bf16.mxu0 0
    %329 = vmatpush1.bf16.xpose.msra.mxu0 0
    %330 = vmatprep.subr.bf16.mxu0 0
    %331 = vmatpush1.bf16.xpose.msra.mxu0 0
    %332 = vmatprep.subr.bf16.mxu0 0
    %333 = vmatpush1.bf16.xpose.msra.mxu0 0
    %334 = vmatprep.mubr.bf16.mxu0 0
    %335 = vmatmul.mubr.bf16.gmra.mrb[0].mxu0 %v297
    %v336 = vpop.f32.mrb[0].mxu0
    %v337 = vadd.f32 0.0, %v336
    %v338 = vpop.f32.mrb[0].mxu0
    %v339 = vpop.f32.mrb[0].mxu0
    %v340 = vpop.f32.mrb[0].mxu0
    %341 = vdwg.mxu0
    %343 = vrot.lane.b32.xlu0 %v193, 112
    %v344 = vpop.permute.xlu0 %343
    %v346 = vsel %vm197, %v344, 0
    %v349 = vsel %vm197, %v193, 0
    %351 = vmatprep.subr.bf16.mxu0 0
    %352 = vmatpush1.bf16.xpose.msra.mxu0 %v349
    %353 = vmatprep.subr.bf16.mxu0 0
    %354 = vmatpush1.bf16.xpose.msra.mxu0 0
    %355 = vmatprep.subr.bf16.mxu0 0
    %356 = vmatpush1.bf16.xpose.msra.mxu0 0
    %357 = vmatprep.subr.bf16.mxu0 0
    %358 = vmatpush1.bf16.xpose.msra.mxu0 0
    %359 = vmatprep.subr.bf16.mxu0 0
    %360 = vmatpush1.bf16.xpose.msra.mxu0 0
    %361 = vmatprep.subr.bf16.mxu0 0
    %362 = vmatpush1.bf16.xpose.msra.mxu0 0
    %363 = vmatprep.subr.bf16.mxu0 0
    %364 = vmatpush1.bf16.xpose.msra.mxu0 0
    %365 = vmatprep.subr.bf16.mxu0 0
    %366 = vmatpush1.bf16.xpose.msra.mxu0 0
    %367 = vmatprep.subr.bf16.mxu0 0
    %368 = vmatpush1.bf16.xpose.msra.mxu0 0
    %369 = vmatprep.subr.bf16.mxu0 0
    %370 = vmatpush1.bf16.xpose.msra.mxu0 0
    %371 = vmatprep.subr.bf16.mxu0 0
    %372 = vmatpush1.bf16.xpose.msra.mxu0 0
    %373 = vmatprep.subr.bf16.mxu0 0
    %374 = vmatpush1.bf16.xpose.msra.mxu0 0
    %375 = vmatprep.subr.bf16.mxu0 0
    %376 = vmatpush1.bf16.xpose.msra.mxu0 0
    %377 = vmatprep.subr.bf16.mxu0 0
    %378 = vmatpush1.bf16.xpose.msra.mxu0 0
    %379 = vmatprep.subr.bf16.mxu0 0
    %380 = vmatpush1.bf16.xpose.msra.mxu0 0
    %381 = vmatprep.subr.bf16.mxu0 0
    %382 = vmatpush1.bf16.xpose.msra.mxu0 0
    %383 = vmatprep.mubr.bf16.mxu0 0
    %384 = vmatmul.mubr.bf16.gmra.mrb[0].mxu0 %v346
    %v385 = vpop.f32.mrb[0].mxu0
    %v386 = vadd.f32 0.0, %v385
    %v387 = vpop.f32.mrb[0].mxu0
    %v388 = vpop.f32.mrb[0].mxu0
    %v389 = vpop.f32.mrb[0].mxu0
    %390 = vdwg.mxu0
    %v391 = vlaneseq
    %v392 = vshrl.u32 %v391, 7
    %v393 = vlaneseq
    %v394 = vand.u32 %v393, 127
    %vm395 = vcmp.ge.s32.totalorder %v392, %v394
    %v396 = vsel %vm395, 1, 0
    %vm397 = vcmp.eq.s32.totalorder %v396, 1
    %v398 = vsel %vm397, %v239, -1e+30
    %v399 = vsel %vm397, %v288, -1e+30
    %v400 = vsel %vm397, %v337, -1e+30
    %v401 = vsel %vm397, %v386, -1e+30
    %vm402 = vcmask 64512
    %v403 = vsel %vm402, %v398, -inf
    %404 = vmax.xlane.f32.xlu0 %v403
    %v405 = vpop.xlane.xlu0 %404
    %v406 = vsel %vm402, %v399, -inf
    %407 = vmax.xlane.f32.xlu0 %v406
    %v408 = vpop.xlane.xlu0 %407
    %v409 = vsel %vm402, %v400, -inf
    %410 = vmax.xlane.f32.xlu0 %v409
    %v411 = vpop.xlane.xlu0 %410
    %v412 = vsel %vm402, %v401, -inf
    %413 = vmax.xlane.f32.xlu0 %v412
    %v414 = vpop.xlane.xlu0 %413
    %v415 = vsub.f32 %v398, %v405
    %v416 = vsub.f32 %v399, %v408
    %v417 = vsub.f32 %v400, %v411
    %v418 = vsub.f32 %v401, %v414
    %v419 = vmul.f32 %v415, 1.442695
    %v420 = vpow.pop %v419
    %v421 = vmul.f32 %v416, 1.442695
    %v422 = vpow.pop %v421
    %v423 = vmul.f32 %v417, 1.442695
    %v424 = vpow.pop %v423
    %v425 = vmul.f32 %v418, 1.442695
    %v426 = vpow.pop %v425
    %v427 = vsel %vm402, %v420, 0.0
    %428 = vadd.xlane.f32.xlu0 %v427
    %v429 = vpop.xlane.xlu0 %428
    %v430 = vsel %vm402, %v422, 0.0
    %431 = vadd.xlane.f32.xlu0 %v430
    %v432 = vpop.xlane.xlu0 %431
    %v433 = vsel %vm402, %v424, 0.0
    %434 = vadd.xlane.f32.xlu0 %v433
    %v435 = vpop.xlane.xlu0 %434
    %v436 = vsel %vm402, %v426, 0.0
    %437 = vadd.xlane.f32.xlu0 %v436
    %v438 = vpop.xlane.xlu0 %437
    %v439 = vpack.c.bf16 %v420, %v420
    %v440 = vpack.c.bf16 %v422, %v422
    %v441 = vpack.c.bf16 %v424, %v424
    %v442 = vpack.c.bf16 %v426, %v426
    %443 = vrot.lane.b32.xlu0 %v190, 96
    %v444 = vpop.permute.xlu0 %443
    %v446 = vsel %vm402, %v439, 0
    %vm448 = vcmask 1043456
    %v450 = vsel %vm448, %v444, 0
    %452 = vmatprep.subr.bf16.mxu0 0
    %453 = vmatpush1.bf16.msra.mxu0 %v450
    %454 = vmatprep.subr.bf16.mxu0 0
    %455 = vmatpush1.bf16.msra.mxu0 0
    %456 = vmatprep.subr.bf16.mxu0 0
    %457 = vmatpush1.bf16.msra.mxu0 0
    %458 = vmatprep.subr.bf16.mxu0 0
    %459 = vmatpush1.bf16.msra.mxu0 0
    %460 = vmatprep.subr.bf16.mxu0 0
    %461 = vmatpush1.bf16.msra.mxu0 0
    %462 = vmatprep.subr.bf16.mxu0 0
    %463 = vmatpush1.bf16.msra.mxu0 0
    %464 = vmatprep.subr.bf16.mxu0 0
    %465 = vmatpush1.bf16.msra.mxu0 0
    %466 = vmatprep.subr.bf16.mxu0 0
    %467 = vmatpush1.bf16.msra.mxu0 0
    %468 = vmatprep.subr.bf16.mxu0 0
    %469 = vmatpush1.bf16.msra.mxu0 0
    %470 = vmatprep.subr.bf16.mxu0 0
    %471 = vmatpush1.bf16.msra.mxu0 0
    %472 = vmatprep.subr.bf16.mxu0 0
    %473 = vmatpush1.bf16.msra.mxu0 0
    %474 = vmatprep.subr.bf16.mxu0 0
    %475 = vmatpush1.bf16.msra.mxu0 0
    %476 = vmatprep.subr.bf16.mxu0 0
    %477 = vmatpush1.bf16.msra.mxu0 0
    %478 = vmatprep.subr.bf16.mxu0 0
    %479 = vmatpush1.bf16.msra.mxu0 0
    %480 = vmatprep.subr.bf16.mxu0 0
    %481 = vmatpush1.bf16.msra.mxu0 0
    %482 = vmatprep.subr.bf16.mxu0 0
    %483 = vmatpush1.bf16.msra.mxu0 0
    %484 = vmatprep.mubr.bf16.mxu0 0
    %485 = vmatmul.mubr.bf16.gmra.mrb[0].mxu0 %v446
    %v486 = vpop.f32.mrb[0].mxu0
    %v487 = vadd.f32 0.0, %v486
    %v488 = vpop.f32.mrb[0].mxu0
    %v489 = vpop.f32.mrb[0].mxu0
    %v490 = vpop.f32.mrb[0].mxu0
    %491 = vdwg.mxu0
    %492 = vrot.lane.b32.xlu0 %v191, 96
    %v493 = vpop.permute.xlu0 %492
    %v495 = vsel %vm402, %v440, 0
    %v498 = vsel %vm448, %v493, 0
    %500 = vmatprep.subr.bf16.mxu0 0
    %501 = vmatpush1.bf16.msra.mxu0 %v498
    %502 = vmatprep.subr.bf16.mxu0 0
    %503 = vmatpush1.bf16.msra.mxu0 0
    %504 = vmatprep.subr.bf16.mxu0 0
    %505 = vmatpush1.bf16.msra.mxu0 0
    %506 = vmatprep.subr.bf16.mxu0 0
    %507 = vmatpush1.bf16.msra.mxu0 0
    %508 = vmatprep.subr.bf16.mxu0 0
    %509 = vmatpush1.bf16.msra.mxu0 0
    %510 = vmatprep.subr.bf16.mxu0 0
    %511 = vmatpush1.bf16.msra.mxu0 0
    %512 = vmatprep.subr.bf16.mxu0 0
    %513 = vmatpush1.bf16.msra.mxu0 0
    %514 = vmatprep.subr.bf16.mxu0 0
    %515 = vmatpush1.bf16.msra.mxu0 0
    %516 = vmatprep.subr.bf16.mxu0 0
    %517 = vmatpush1.bf16.msra.mxu0 0
    %518 = vmatprep.subr.bf16.mxu0 0
    %519 = vmatpush1.bf16.msra.mxu0 0
    %520 = vmatprep.subr.bf16.mxu0 0
    %521 = vmatpush1.bf16.msra.mxu0 0
    %522 = vmatprep.subr.bf16.mxu0 0
    %523 = vmatpush1.bf16.msra.mxu0 0
    %524 = vmatprep.subr.bf16.mxu0 0
    %525 = vmatpush1.bf16.msra.mxu0 0
    %526 = vmatprep.subr.bf16.mxu0 0
    %527 = vmatpush1.bf16.msra.mxu0 0
    %528 = vmatprep.subr.bf16.mxu0 0
    %529 = vmatpush1.bf16.msra.mxu0 0
    %530 = vmatprep.subr.bf16.mxu0 0
    %531 = vmatpush1.bf16.msra.mxu0 0
    %532 = vmatprep.mubr.bf16.mxu0 0
    %533 = vmatmul.mubr.bf16.gmra.mrb[0].mxu0 %v495
    %v534 = vpop.f32.mrb[0].mxu0
    %v535 = vadd.f32 0.0, %v534
    %v536 = vpop.f32.mrb[0].mxu0
    %v537 = vpop.f32.mrb[0].mxu0
    %v538 = vpop.f32.mrb[0].mxu0
    %539 = vdwg.mxu0
    %540 = vrot.lane.b32.xlu0 %v192, 96
    %v541 = vpop.permute.xlu0 %540
    %v543 = vsel %vm402, %v441, 0
    %v546 = vsel %vm448, %v541, 0
    %548 = vmatprep.subr.bf16.mxu0 0
    %549 = vmatpush1.bf16.msra.mxu0 %v546
    %550 = vmatprep.subr.bf16.mxu0 0
    %551 = vmatpush1.bf16.msra.mxu0 0
    %552 = vmatprep.subr.bf16.mxu0 0
    %553 = vmatpush1.bf16.msra.mxu0 0
    %554 = vmatprep.subr.bf16.mxu0 0
    %555 = vmatpush1.bf16.msra.mxu0 0
    %556 = vmatprep.subr.bf16.mxu0 0
    %557 = vmatpush1.bf16.msra.mxu0 0
    %558 = vmatprep.subr.bf16.mxu0 0
    %559 = vmatpush1.bf16.msra.mxu0 0
    %560 = vmatprep.subr.bf16.mxu0 0
    %561 = vmatpush1.bf16.msra.mxu0 0
    %562 = vmatprep.subr.bf16.mxu0 0
    %563 = vmatpush1.bf16.msra.mxu0 0
    %564 = vmatprep.subr.bf16.mxu0 0
    %565 = vmatpush1.bf16.msra.mxu0 0
    %566 = vmatprep.subr.bf16.mxu0 0
    %567 = vmatpush1.bf16.msra.mxu0 0
    %568 = vmatprep.subr.bf16.mxu0 0
    %569 = vmatpush1.bf16.msra.mxu0 0
    %570 = vmatprep.subr.bf16.mxu0 0
    %571 = vmatpush1.bf16.msra.mxu0 0
    %572 = vmatprep.subr.bf16.mxu0 0
    %573 = vmatpush1.bf16.msra.mxu0 0
    %574 = vmatprep.subr.bf16.mxu0 0
    %575 = vmatpush1.bf16.msra.mxu0 0
    %576 = vmatprep.subr.bf16.mxu0 0
    %577 = vmatpush1.bf16.msra.mxu0 0
    %578 = vmatprep.subr.bf16.mxu0 0
    %579 = vmatpush1.bf16.msra.mxu0 0
    %580 = vmatprep.mubr.bf16.mxu0 0
    %581 = vmatmul.mubr.bf16.gmra.mrb[0].mxu0 %v543
    %v582 = vpop.f32.mrb[0].mxu0
    %v583 = vadd.f32 0.0, %v582
    %v584 = vpop.f32.mrb[0].mxu0
    %v585 = vpop.f32.mrb[0].mxu0
    %v586 = vpop.f32.mrb[0].mxu0
    %587 = vdwg.mxu0
    %588 = vrot.lane.b32.xlu0 %v193, 96
    %v589 = vpop.permute.xlu0 %588
    %v591 = vsel %vm402, %v442, 0
    %v594 = vsel %vm448, %v589, 0
    %596 = vmatprep.subr.bf16.mxu0 0
    %597 = vmatpush1.bf16.msra.mxu0 %v594
    %598 = vmatprep.subr.bf16.mxu0 0
    %599 = vmatpush1.bf16.msra.mxu0 0
    %600 = vmatprep.subr.bf16.mxu0 0
    %601 = vmatpush1.bf16.msra.mxu0 0
    %602 = vmatprep.subr.bf16.mxu0 0
    %603 = vmatpush1.bf16.msra.mxu0 0
    %604 = vmatprep.subr.bf16.mxu0 0
    %605 = vmatpush1.bf16.msra.mxu0 0
    %606 = vmatprep.subr.bf16.mxu0 0
    %607 = vmatpush1.bf16.msra.mxu0 0
    %608 = vmatprep.subr.bf16.mxu0 0
    %609 = vmatpush1.bf16.msra.mxu0 0
    %610 = vmatprep.subr.bf16.mxu0 0
    %611 = vmatpush1.bf16.msra.mxu0 0
    %612 = vmatprep.subr.bf16.mxu0 0
    %613 = vmatpush1.bf16.msra.mxu0 0
    %614 = vmatprep.subr.bf16.mxu0 0
    %615 = vmatpush1.bf16.msra.mxu0 0
    %616 = vmatprep.subr.bf16.mxu0 0
    %617 = vmatpush1.bf16.msra.mxu0 0
    %618 = vmatprep.subr.bf16.mxu0 0
    %619 = vmatpush1.bf16.msra.mxu0 0
    %620 = vmatprep.subr.bf16.mxu0 0
    %621 = vmatpush1.bf16.msra.mxu0 0
    %622 = vmatprep.subr.bf16.mxu0 0
    %623 = vmatpush1.bf16.msra.mxu0 0
    %624 = vmatprep.subr.bf16.mxu0 0
    %625 = vmatpush1.bf16.msra.mxu0 0
    %626 = vmatprep.subr.bf16.mxu0 0
    %627 = vmatpush1.bf16.msra.mxu0 0
    %628 = vmatprep.mubr.bf16.mxu0 0
    %629 = vmatmul.mubr.bf16.gmra.mrb[0].mxu0 %v591
    %v630 = vpop.f32.mrb[0].mxu0
    %v631 = vadd.f32 0.0, %v630
    %v632 = vpop.f32.mrb[0].mxu0
    %v633 = vpop.f32.mrb[0].mxu0
    %v634 = vpop.f32.mrb[0].mxu0
    %635 = vdwg.mxu0
    %v636 = vrcp.pop %v429
    %v637 = vrcp.pop %v432
    %v638 = vrcp.pop %v435
    %v639 = vrcp.pop %v438
    %v640 = vmul.f32 %v487, %v636
    %v641 = vmul.f32 %v535, %v637
    %v642 = vmul.f32 %v583, %v638
    %v643 = vmul.f32 %v631, %v639
    %644 = vst.msk [vmem:[#allocation2] sm:$0xff] %vm197, %v640
    %645 = vst.msk [vmem:[#allocation2 + $0x8] sm:$0xff] %vm197, %v641
    %646 = vst.msk [vmem:[#allocation2 + $0x10] sm:$0xff] %vm197, %v642
    %647 = vst.msk [vmem:[#allocation2 + $0x18] sm:$0xff] %vm197, %v643
    // Predicated region
    $region10: #{tpu_custom_call.1} parent=1 // pred_check
      _
    $region11: #{tpu_custom_call.1} parent=1 // pred_check_branch
      %649 = sbr.rel (0) target = $region13
    $region12: #{tpu_custom_call.1} parent=1 // pred_region
      %s651 = ssub.s32 512, 512
      %652 = vsyncadd [#allocation3], %s651
      %s653 = sshll.u32 [#allocation2], 4
      %s654 = int_to_ptr.vmem [resolvable:$true] %s653
      %659 = dma.vmem_to_hbm [thread:$0]  %s654, 512, %s2, [#allocation3], 128, 128, 8
    $region13: #{tpu_custom_call.1} parent=1 // pred_fallthru
      _
    // Predicated region
    $region14: #{tpu_custom_call.1} parent=1 // pred_check
      _
    $region15: #{tpu_custom_call.1} parent=1 // pred_check_branch
      %661 = sbr.rel (0) target = $region17
    $region16: #{tpu_custom_call.1} parent=1 // pred_region
      %662 = dma.done [#allocation3], 512
    $region17: #{tpu_custom_call.1} parent=1 // pred_fallthru
      _
    %663 = vsyncpa [#allocation3], 1

</llo_original>
